<compile_context>
chip_gen: v7x
topology: tpu7x:2x2x1
jax: 0.10.0
libtpu: 0.0.40
codegen_flags: <defaults>
</compile_context>

<pallas_src>
import jax
import jax.numpy as jnp
from jax.experimental import pallas as pl
from jax.experimental.pallas import tpu as pltpu

IN_FEATURES = 3
OUT_FEATURES = 1
NUM_PARAMS = IN_FEATURES + 1      # w0, w1, w2, bias
TILE_CAP = 65536                  # lanes per grid step (multiple of 128)


def _linreg_kernel(w_ref, x_ref, o_ref):
    # w_ref: (4,) f32 in SMEM  -- [w0, w1, w2, bias]
    # x_ref: (3, tb) f32 in VMEM -- features on sublanes, batch on lanes
    # o_ref: (1, tb) f32 in VMEM -- lane-dense output row
    acc = x_ref[0:1, :] * w_ref[0]
    for k in range(1, IN_FEATURES):          # unrolled at trace time
        acc = acc + x_ref[k:k + 1, :] * w_ref[k]
    o_ref[...] = acc + w_ref[IN_FEATURES]    # scalar bias add


def prepare_params(weight, bias):
    """Flatten nn.Linear(3,1) params ONCE into a (4,) SMEM-friendly vector.

    weight: (1, 3) f32 (PyTorch nn.Linear layout), bias: (1,) f32.
    Returns [w0, w1, w2, b] as f32.
    """
    assert weight.shape == (OUT_FEATURES, IN_FEATURES), weight.shape
    assert bias.shape == (OUT_FEATURES,), bias.shape
    return jnp.concatenate(
        [weight[0].astype(jnp.float32), bias.astype(jnp.float32)])


def linear_pallas(x, params, *, tile_cap=TILE_CAP):
    """Forward pass of nn.Linear(3, 1): y = x @ W.T + b, x: (B, 3)."""
    B = x.shape[0]
    if B == 0:                                # guard: empty batch
        return jnp.zeros((0, OUT_FEATURES), jnp.float32)

    # Pad the batch (lane axis) to a multiple of 128; only pad further to a
    # whole tile when more than one grid step is needed.
    b128 = ((B + 127) // 128) * 128
    tb = min(tile_cap, b128)
    b_pad = ((b128 + tb - 1) // tb) * tb

    # Batch-on-lanes layout: (B, 3) -> (3, B_pad). Padded lanes hold zeros
    # (they produce `bias`, which is sliced off below).
    xt = x.astype(jnp.float32).T
    if b_pad != B:
        xt = jnp.pad(xt, ((0, 0), (0, b_pad - B)))

    out = pl.pallas_call(
        _linreg_kernel,
        out_shape=jax.ShapeDtypeStruct((1, b_pad), jnp.float32),
        grid=(b_pad // tb,),
        in_specs=[
            # 4 scalars resident in SMEM for the whole kernel.
            pl.BlockSpec(memory_space=pltpu.MemorySpace.SMEM),
            # Lane-dense input block: full feature extent, tb lanes of batch.
            pl.BlockSpec((IN_FEATURES, tb), lambda i: (0, i)),
        ],
        out_specs=pl.BlockSpec((1, tb), lambda i: (0, i)),
        compiler_params=pltpu.CompilerParams(
            # Memory-bound: no benefit from megacore sharding of the grid.
            dimension_semantics=("arbitrary",)),
    )(params, xt)

    return out[0, :B].reshape(B, OUT_FEATURES)


def init_params(key):
    """Deterministic init mimicking nn.Linear(3, 1): U(-1/sqrt(3), 1/sqrt(3))."""
    kw, kb = jax.random.split(key)
    bound = 1.0 / jnp.sqrt(jnp.float32(IN_FEATURES))
    weight = jax.random.uniform(
        kw, (OUT_FEATURES, IN_FEATURES), jnp.float32, -bound, bound)
    bias = jax.random.uniform(kb, (OUT_FEATURES,), jnp.float32, -bound, bound)
    return weight, bias


if __name__ == "__main__":
    key = jax.random.PRNGKey(0)
    k_params, k_x1, k_x2 = jax.random.split(key, 3)

    weight, bias = init_params(k_params)
    params = prepare_params(weight, bias)   # flattened once, reused per call

    # Small case (batch=4, features=3), matching the module spec.
    x_small = jax.random.normal(k_x1, (4, IN_FEATURES), jnp.float32)
    y_small = linear_pallas(x_small, params)
    jax.block_until_ready(y_small)
    ref_small = x_small @ weight.T + bias
    assert y_small.shape == (4, OUT_FEATURES), y_small.shape
    assert jnp.allclose(y_small, ref_small, atol=1e-5, rtol=1e-5)

    # Larger, non-128-aligned batch to exercise lane padding / slicing.
    x_big = jax.random.normal(k_x2, (2050, IN_FEATURES), jnp.float32)
    y_big = linear_pallas(x_big, params)
    jax.block_until_ready(y_big)
    ref_big = x_big @ weight.T + bias
    assert y_big.shape == (2050, OUT_FEATURES), y_big.shape
    assert jnp.allclose(y_big, ref_big, atol=1e-5, rtol=1e-5)

    print("KERNEL_OK")
</pallas_src>

<mosaic_0001>
module attributes {stable_mosaic.version = 11 : i64} {
  func.func @_linreg_kernel(%arg0: i32, %arg1: memref<4xf32, #tpu.memory_space<smem>>, %arg2: memref<3x128xf32, #tpu.memory_space<vmem>>, %arg3: memref<1x128xf32, #tpu.memory_space<vmem>>) attributes {dimension_semantics = [#tpu.dimension_semantics<arbitrary>], iteration_bounds = array<i64: 1>, scalar_prefetch = 0 : i64, scratch_operands = 0 : i64, tpu.core_type = #tpu.core_type<tc>, window_params = [{transform_indices = @transform_0, window_bounds = array<i64: 4>}, {transform_indices = @transform_1, window_bounds = array<i64: 3, 128>}, {transform_indices = @transform_2, window_bounds = array<i64: 1, 128>}]} {
    %c0 = arith.constant 0 : index
    %c0_0 = arith.constant 0 : index
    %0 = vector.load %arg2[%c0, %c0_0] : memref<3x128xf32, #tpu.memory_space<vmem>>, vector<1x128xf32>
    %c0_1 = arith.constant 0 : index
    %1 = memref.load %arg1[%c0_1] : memref<4xf32, #tpu.memory_space<smem>>
    %2 = vector.broadcast %1 : f32 to vector<1x128xf32>
    %3 = arith.mulf %0, %2 : vector<1x128xf32>
    %c1 = arith.constant 1 : index
    %c0_2 = arith.constant 0 : index
    %4 = vector.load %arg2[%c1, %c0_2] : memref<3x128xf32, #tpu.memory_space<vmem>>, vector<1x128xf32>
    %c1_3 = arith.constant 1 : index
    %5 = memref.load %arg1[%c1_3] : memref<4xf32, #tpu.memory_space<smem>>
    %6 = vector.broadcast %5 : f32 to vector<1x128xf32>
    %7 = arith.mulf %4, %6 : vector<1x128xf32>
    %8 = arith.addf %3, %7 : vector<1x128xf32>
    %c2 = arith.constant 2 : index
    %c0_4 = arith.constant 0 : index
    %9 = vector.load %arg2[%c2, %c0_4] : memref<3x128xf32, #tpu.memory_space<vmem>>, vector<1x128xf32>
    %c2_5 = arith.constant 2 : index
    %10 = memref.load %arg1[%c2_5] : memref<4xf32, #tpu.memory_space<smem>>
    %11 = vector.broadcast %10 : f32 to vector<1x128xf32>
    %12 = arith.mulf %9, %11 : vector<1x128xf32>
    %13 = arith.addf %8, %12 : vector<1x128xf32>
    %c3 = arith.constant 3 : index
    %14 = memref.load %arg1[%c3] : memref<4xf32, #tpu.memory_space<smem>>
    %15 = vector.broadcast %14 : f32 to vector<1x128xf32>
    %16 = arith.addf %13, %15 : vector<1x128xf32>
    %c0_6 = arith.constant 0 : index
    %c0_7 = arith.constant 0 : index
    %17 = vector.load %arg3[%c0_6, %c0_7] : memref<1x128xf32, #tpu.memory_space<vmem>>, vector<1x128xf32>
    tpu.vector_store %arg3[%c0_6, %c0_7], %16 {strides = array<i32>} : memref<1x128xf32, #tpu.memory_space<vmem>>, vector<1x128xf32>,
    return
  }
  func.func @transform_0(%arg0: i32) -> i32 {
    %c0_i32 = arith.constant 0 : i32
    %c0_i32_0 = arith.constant 0 : i32
    return %c0_i32 : i32
  }
  func.func @transform_1(%arg0: i32) -> (i32, i32) {
    %c0_i32 = arith.constant 0 : i32
    %c0_i32_0 = arith.constant 0 : i32
    return %c0_i32, %arg0 : i32, i32
  }
  func.func @transform_2(%arg0: i32) -> (i32, i32) {
    %c0_i32 = arith.constant 0 : i32
    %c0_i32_0 = arith.constant 0 : i32
    return %c0_i32, %arg0 : i32, i32
  }
}

</mosaic_0001>

<llo_original>
// kernel: tpu_custom_call.1
$region0: #{tpu_custom_call.1}
  #allocation0 [shape = 'u32[]', space=smem, size = 0x4, offset = 0x4, fixed_abs, tag = 'smem constant byte address 0x4 - core index']
  #allocation1 [shape = 'u32[144,128]{1,0:T(1,128)}', space=vmem, size = 0x12000, scoped, tag = 'internal scratch']
  %s0 = inlined_call_operand.hbm [shape: f32[4], index: 0, kind: input, shape index: {}]
  %s1 = inlined_call_operand.hbm [shape: f32[3,128], index: 1, kind: input, shape index: {}]
  %s2 = inlined_call_operand.hbm [shape: f32[1,128], index: 2, kind: output, shape index: {}]
  %s3 = sld [smem:[#allocation0]]
  $region26: #{tpu_custom_call.1} parent=0
    _
  %s5 = ssub.s32 1, %s3
  %s6 = scalar_select 0, %s5, %s3
  $region1: #{tpu_custom_call.1} parent=0
    #allocation2 [shape = 'u8[512]{0}', space=smem, size = 0x200, scoped, tag = 'input window, operand 0, single buffered']
    #allocation3 [shape = 's32[1]{0}', space=sflag, size = 0x4, scoped, tag = 'scoped memory for tpu_custom_call.1']
    #allocation4 [shape = 's32[1]{0}', space=sflag, size = 0x4, scoped, tag = 'scoped memory for tpu_custom_call.1']
    #allocation5 [shape = 's32[1]{0}', space=sflag, size = 0x4, scoped, tag = 'scoped memory for tpu_custom_call.1']
    #allocation6 [shape = 'u8[2048]{0}', space=vmem, size = 0x800, scoped, tag = 'input window, operand 1, single buffered']
    #allocation7 [shape = 'u8[512]{0}', space=vmem, size = 0x400, scoped, tag = 'output window, operand 0, single buffered']
    %7 = vsyncpa [#allocation5], 0
    %8 = vsyncpa [#allocation3], 0
    %9 = vsyncpa [#allocation4], 0
    // Predicated region
    $region2: #{tpu_custom_call.1} parent=1 // pred_check
      _
    $region3: #{tpu_custom_call.1} parent=1 // pred_check_branch
      %11 = sbr.rel (0) target = $region5
    $region4: #{tpu_custom_call.1} parent=1 // pred_region
      %s13 = ssub.s32 16, 16
      %14 = vsyncadd [#allocation5], %s13
      %17 = dma.hbm_to_smem %s0, 16, [#allocation2], [#allocation5]
    $region5: #{tpu_custom_call.1} parent=1 // pred_fallthru
      _
    // Predicated region
    $region6: #{tpu_custom_call.1} parent=1 // pred_check
      _
    $region7: #{tpu_custom_call.1} parent=1 // pred_check_branch
      %19 = sbr.rel (0) target = $region9
    $region8: #{tpu_custom_call.1} parent=1 // pred_region
      %s21 = ssub.s32 64, 64
      %22 = vsyncadd [#allocation3], %s21
      %s24 = sshll.u32 [#allocation6], 4
      %s25 = int_to_ptr.vmem [resolvable:$true] %s24
      %27 = dma.hbm_to_vmem [thread:$0]  %s1, 64, %s25, [#allocation3]
    $region9: #{tpu_custom_call.1} parent=1 // pred_fallthru
      _
    // Predicated region
    $region10: #{tpu_custom_call.1} parent=1 // pred_check
      _
    $region11: #{tpu_custom_call.1} parent=1 // pred_check_branch
      %29 = sbr.rel (0) target = $region13
    $region12: #{tpu_custom_call.1} parent=1 // pred_region
      %30 = dma.done [#allocation5], 16
    $region13: #{tpu_custom_call.1} parent=1 // pred_fallthru
      _
    // Predicated region
    $region14: #{tpu_custom_call.1} parent=1 // pred_check
      _
    $region15: #{tpu_custom_call.1} parent=1 // pred_check_branch
      %32 = sbr.rel (0) target = $region17
    $region16: #{tpu_custom_call.1} parent=1 // pred_region
      %33 = dma.done [#allocation3], 64
    $region17: #{tpu_custom_call.1} parent=1 // pred_fallthru
      _
    %34 = sfence
    %v35 = vld [vmem:[#allocation6] sm:$0x1]
    %s36 = sld [smem:[#allocation2]]
    %v37 = vstv %s36
    %v38 = vmul.f32 %v35, %v37
    %v39 = vld [vmem:[#allocation6 + $0x1] sm:$0x1]
    %s40 = sld [smem:[#allocation2 + $0x1]]
    %v41 = vstv %s40
    %v42 = vmul.f32 %v39, %v41
    %v43 = vadd.f32 %v38, %v42
    %v44 = vld [vmem:[#allocation6 + $0x2] sm:$0x1]
    %s45 = sld [smem:[#allocation2 + $0x2]]
    %v46 = vstv %s45
    %v47 = vmul.f32 %v44, %v46
    %v48 = vadd.f32 %v43, %v47
    %s49 = sld [smem:[#allocation2 + $0x3]]
    %v50 = vstv %s49
    %v51 = vadd.f32 %v48, %v50
    %52 = vst [vmem:[#allocation7] sm:$0x1] %v51
    // Predicated region
    $region18: #{tpu_custom_call.1} parent=1 // pred_check
      _
    $region19: #{tpu_custom_call.1} parent=1 // pred_check_branch
      %54 = sbr.rel (0) target = $region21
    $region20: #{tpu_custom_call.1} parent=1 // pred_region
      %s56 = ssub.s32 16, 16
      %57 = vsyncadd [#allocation4], %s56
      %s59 = sshll.u32 [#allocation7], 4
      %s60 = int_to_ptr.vmem [resolvable:$true] %s59
      %62 = dma.vmem_to_hbm [thread:$0]  %s60, 16, %s2, [#allocation4]
    $region21: #{tpu_custom_call.1} parent=1 // pred_fallthru
      _
    // Predicated region
    $region22: #{tpu_custom_call.1} parent=1 // pred_check
      _
    $region23: #{tpu_custom_call.1} parent=1 // pred_check_branch
      %64 = sbr.rel (0) target = $region25
    $region24: #{tpu_custom_call.1} parent=1 // pred_region
      %65 = dma.done [#allocation4], 16
    $region25: #{tpu_custom_call.1} parent=1 // pred_fallthru
      _
    %66 = vsyncpa [#allocation3], 1
    %67 = vsyncpa [#allocation4], 1
    %68 = vsyncpa [#allocation5], 1

</llo_original>
